<compile_context>
chip_gen: v5e
topology: v5e:2x2
jax: 0.10.0
libtpu: 0.0.40
codegen_flags: <defaults>
</compile_context>

<pallas_src>
import jax
import jax.numpy as jnp
from jax.experimental import pallas as pl
from jax.experimental.pallas import tpu as pltpu

IN_DIM = 39
HID_DIM = 39
OUT_DIM = 1
NEG_SLOPE = 0.01  # nn.LeakyReLU() default negative_slope


def _leaky_relu(x):
    return jnp.where(x > 0, x, NEG_SLOPE * x)


def _round_up(n, m):
    return ((n + m - 1) // m) * m


def discriminator_kernel(x_ref, w1_ref, b1_ref, w2_ref, b2_ref, w3_ref, b3_ref, o_ref):
    # x: (TB, 39) bf16; w1/w2: bf16 (MXU inputs); b1/b2/b3 and w3 row: f32.
    x = x_ref[...]

    # Layer 1: bf16 MXU matmul with f32 accumulation; elementwise in f32.
    h1 = jnp.dot(x, w1_ref[...], preferred_element_type=jnp.float32) + b1_ref[...]
    h1 = _leaky_relu(h1)

    # Layer 2: cast activations back to bf16 only for the MXU input side.
    h2 = jnp.dot(h1.astype(jnp.bfloat16), w2_ref[...],
                 preferred_element_type=jnp.float32) + b2_ref[...]
    h2 = _leaky_relu(h2)

    # Layer 3 has N=1: VPU broadcast-multiply + cross-lane (XLU) reduce avoids
    # wasting an MXU pass / result-FIFO drain on a 1-wide matmul.
    out = jnp.sum(h2 * w3_ref[...], axis=-1, keepdims=True) + b3_ref[...]
    o_ref[...] = out.astype(o_ref.dtype)


def discriminator_forward(x, params, *, block_rows=1024):
    """x: (B, 39) float32 -> (B, 1) float32."""
    w1, b1, w2, b2, w3, b3 = params
    B = x.shape[0]

    # Batch tile: large enough to amortize the ~0.35 us per-grid-step overhead,
    # tiny vs VMEM (TB * 39 * (2+4) B * double-buffering + ~12 KB of weights is
    # far below the 32 MiB scoped limit, so also safe on v7x's 64 MiB VMEM).
    TB = min(block_rows, _round_up(B, 8))
    B_pad = _round_up(B, TB)
    if B_pad != B:
        x = jnp.pad(x, ((0, B_pad - B), (0, 0)))
    num_tiles = B_pad // TB

    # bf16 for the streamed activations and the two square weight matrices:
    # halves HBM traffic on the dominant byte stream and is the MXU-native width.
    # NOTE: do NOT pad the 39-wide feature dims in HBM (fits one MXU pass already).
    x_bf = x.astype(jnp.bfloat16)
    w1_bf = w1.astype(jnp.bfloat16)
    w2_bf = w2.astype(jnp.bfloat16)
    w3_row = w3.reshape(1, HID_DIM).astype(jnp.float32)  # (39,1) column -> (1,39) row
    b1 = b1.astype(jnp.float32)
    b2 = b2.astype(jnp.float32)
    b3 = b3.astype(jnp.float32)

    # Constant index_map -> block never changes across grid steps, so the tiny
    # parameters stay resident in VMEM instead of being re-DMA'd per step.
    const = lambda shape: pl.BlockSpec(shape, lambda i: (0, 0))

    flops = 2 * B_pad * (2 * HID_DIM * HID_DIM + HID_DIM) + 5 * B_pad * HID_DIM
    bytes_accessed = (B_pad * IN_DIM * 2            # x (bf16)
                      + B_pad * OUT_DIM * 4         # output (f32)
                      + 2 * HID_DIM * HID_DIM * 2   # w1, w2 (bf16)
                      + 3 * HID_DIM * 4)            # biases + w3 row (f32)

    out = pl.pallas_call(
        discriminator_kernel,
        out_shape=jax.ShapeDtypeStruct((B_pad, OUT_DIM), jnp.float32),
        grid=(num_tiles,),
        in_specs=[
            pl.BlockSpec((TB, IN_DIM), lambda i: (i, 0)),
            const(w1_bf.shape), const(b1.shape),
            const(w2_bf.shape), const(b2.shape),
            const(w3_row.shape), const(b3.shape),
        ],
        out_specs=pl.BlockSpec((TB, OUT_DIM), lambda i: (i, 0)),
        compiler_params=pltpu.CompilerParams(
            dimension_semantics=("parallel",)),  # megacore split of the batch on v7x
        cost_estimate=pl.CostEstimate(
            flops=flops, transcendentals=0, bytes_accessed=bytes_accessed),
    )(x_bf, w1_bf, b1, w2_bf, b2, w3_row, b3)

    return out[:B] if B_pad != B else out


def init_params(key):
    """Deterministic init mimicking PyTorch nn.Linear default (U(-1/sqrt(in), 1/sqrt(in))).

    Weights are stored transposed: (in_features, out_features).
    Biases are stored as (1, out_features) for 2D VMEM friendliness.
    """
    keys = jax.random.split(key, 6)

    def linear(kw, kb, fan_in, fan_out):
        bound = 1.0 / jnp.sqrt(float(fan_in))
        w = jax.random.uniform(kw, (fan_in, fan_out), jnp.float32, -bound, bound)
        b = jax.random.uniform(kb, (1, fan_out), jnp.float32, -bound, bound)
        return w, b

    w1, b1 = linear(keys[0], keys[1], IN_DIM, HID_DIM)
    w2, b2 = linear(keys[2], keys[3], HID_DIM, HID_DIM)
    w3, b3 = linear(keys[4], keys[5], HID_DIM, OUT_DIM)
    return (w1, b1, w2, b2, w3, b3)


def reference_forward(x, params):
    """Pure-JAX f32 reference of the same MLP for correctness checking."""
    w1, b1, w2, b2, w3, b3 = params
    h1 = x @ w1 + b1
    h1 = jnp.where(h1 > 0, h1, NEG_SLOPE * h1)
    h2 = h1 @ w2 + b2
    h2 = jnp.where(h2 > 0, h2, NEG_SLOPE * h2)
    return h2 @ w3 + b3


if __name__ == "__main__":
    key = jax.random.PRNGKey(0)
    k_params, k_x1, k_x2 = jax.random.split(key, 3)

    params = init_params(k_params)

    # Small smoke test (single tile).
    batch = 8
    x = jax.random.normal(k_x1, (batch, IN_DIM), dtype=jnp.float32)
    out = jax.block_until_ready(discriminator_forward(x, params))
    ref = reference_forward(x, params)
    assert out.shape == (batch, OUT_DIM), out.shape
    # bf16 activation/weight stream -> loosened tolerance vs the f32 reference.
    assert jnp.allclose(out, ref, atol=5e-2, rtol=5e-2), (out, ref)

    # Multi-tile + batch-padding path (B not a multiple of the tile size).
    batch2 = 300
    x2 = jax.random.normal(k_x2, (batch2, IN_DIM), dtype=jnp.float32)
    out2 = jax.block_until_ready(discriminator_forward(x2, params, block_rows=128))
    ref2 = reference_forward(x2, params)
    assert out2.shape == (batch2, OUT_DIM), out2.shape
    assert jnp.allclose(out2, ref2, atol=5e-2, rtol=5e-2), float(jnp.max(jnp.abs(out2 - ref2)))

    print("KERNEL_OK")
</pallas_src>

<mosaic_0001>
module attributes {stable_mosaic.version = 11 : i64} {
  func.func @discriminator_kernel(%arg0: i32, %arg1: memref<8x39xbf16, #tpu.memory_space<vmem>>, %arg2: memref<39x39xbf16, #tpu.memory_space<vmem>>, %arg3: memref<1x39xf32, #tpu.memory_space<vmem>>, %arg4: memref<39x39xbf16, #tpu.memory_space<vmem>>, %arg5: memref<1x39xf32, #tpu.memory_space<vmem>>, %arg6: memref<1x39xf32, #tpu.memory_space<vmem>>, %arg7: memref<1x1xf32, #tpu.memory_space<vmem>>, %arg8: memref<8x1xf32, #tpu.memory_space<vmem>>) attributes {dimension_semantics = [#tpu.dimension_semantics<parallel>], iteration_bounds = array<i64: 1>, scalar_prefetch = 0 : i64, scratch_operands = 0 : i64, tpu.core_type = #tpu.core_type<tc>, window_params = [{transform_indices = @transform_0, window_bounds = array<i64: 8, 39>}, {pipeline_mode = #tpu.pipeline_mode<synchronous>, transform_indices = @transform_1, window_bounds = array<i64: 39, 39>}, {pipeline_mode = #tpu.pipeline_mode<synchronous>, transform_indices = @transform_2, window_bounds = array<i64: 1, 39>}, {pipeline_mode = #tpu.pipeline_mode<synchronous>, transform_indices = @transform_3, window_bounds = array<i64: 39, 39>}, {pipeline_mode = #tpu.pipeline_mode<synchronous>, transform_indices = @transform_4, window_bounds = array<i64: 1, 39>}, {pipeline_mode = #tpu.pipeline_mode<synchronous>, transform_indices = @transform_5, window_bounds = array<i64: 1, 39>}, {pipeline_mode = #tpu.pipeline_mode<synchronous>, transform_indices = @transform_6, window_bounds = array<i64: 1, 1>}, {transform_indices = @transform_7, window_bounds = array<i64: 8, 1>}]} {
    %c0 = arith.constant 0 : index
    %c0_0 = arith.constant 0 : index
    %0 = vector.load %arg1[%c0, %c0_0] : memref<8x39xbf16, #tpu.memory_space<vmem>>, vector<8x39xbf16>
    %c0_1 = arith.constant 0 : index
    %c0_2 = arith.constant 0 : index
    %1 = vector.load %arg2[%c0_1, %c0_2] : memref<39x39xbf16, #tpu.memory_space<vmem>>, vector<39x39xbf16>
    %cst = arith.constant dense<0.000000e+00> : vector<8x39xf32>
    %2 = tpu.matmul %0, %1, %cst {dimension_numbers = #tpu.dot_dimension_numbers<[1], [0], [0], [1], [0, 0, 1, 1], [], []>} : vector<8x39xbf16>, vector<39x39xbf16>, vector<8x39xf32> -> vector<8x39xf32>
    %c0_3 = arith.constant 0 : index
    %c0_4 = arith.constant 0 : index
    %3 = vector.load %arg3[%c0_3, %c0_4] : memref<1x39xf32, #tpu.memory_space<vmem>>, vector<1x39xf32>
    %4 = vector.broadcast %3 : vector<1x39xf32> to vector<8x39xf32>
    %5 = arith.addf %2, %4 : vector<8x39xf32>
    %cst_5 = arith.constant 0.000000e+00 : f32
    %6 = vector.broadcast %cst_5 : f32 to vector<8x39xf32>
    %7 = arith.cmpf ogt, %5, %6 : vector<8x39xf32>
    %cst_6 = arith.constant 0.00999999977 : f32
    %8 = vector.broadcast %cst_6 : f32 to vector<8x39xf32>
    %9 = arith.mulf %8, %5 : vector<8x39xf32>
    %10 = arith.select %7, %5, %9 : vector<8x39xi1>, vector<8x39xf32>
    %11 = arith.truncf %10 : vector<8x39xf32> to vector<8x39xbf16>
    %c0_7 = arith.constant 0 : index
    %c0_8 = arith.constant 0 : index
    %12 = vector.load %arg4[%c0_7, %c0_8] : memref<39x39xbf16, #tpu.memory_space<vmem>>, vector<39x39xbf16>
    %cst_9 = arith.constant dense<0.000000e+00> : vector<8x39xf32>
    %13 = tpu.matmul %11, %12, %cst_9 {dimension_numbers = #tpu.dot_dimension_numbers<[1], [0], [0], [1], [0, 0, 1, 1], [], []>} : vector<8x39xbf16>, vector<39x39xbf16>, vector<8x39xf32> -> vector<8x39xf32>
    %c0_10 = arith.constant 0 : index
    %c0_11 = arith.constant 0 : index
    %14 = vector.load %arg5[%c0_10, %c0_11] : memref<1x39xf32, #tpu.memory_space<vmem>>, vector<1x39xf32>
    %15 = vector.broadcast %14 : vector<1x39xf32> to vector<8x39xf32>
    %16 = arith.addf %13, %15 : vector<8x39xf32>
    %cst_12 = arith.constant 0.000000e+00 : f32
    %17 = vector.broadcast %cst_12 : f32 to vector<8x39xf32>
    %18 = arith.cmpf ogt, %16, %17 : vector<8x39xf32>
    %cst_13 = arith.constant 0.00999999977 : f32
    %19 = vector.broadcast %cst_13 : f32 to vector<8x39xf32>
    %20 = arith.mulf %19, %16 : vector<8x39xf32>
    %21 = arith.select %18, %16, %20 : vector<8x39xi1>, vector<8x39xf32>
    %c0_14 = arith.constant 0 : index
    %c0_15 = arith.constant 0 : index
    %22 = vector.load %arg6[%c0_14, %c0_15] : memref<1x39xf32, #tpu.memory_space<vmem>>, vector<1x39xf32>
    %23 = vector.broadcast %22 : vector<1x39xf32> to vector<8x39xf32>
    %24 = arith.mulf %21, %23 : vector<8x39xf32>
    %cst_16 = arith.constant dense<0.000000e+00> : vector<8xf32>
    %25 = vector.multi_reduction <add>, %24, %cst_16 [1] : vector<8x39xf32> to vector<8xf32>
    %26 = vector.shape_cast %25 : vector<8xf32> to vector<8x1xf32>
    %c0_17 = arith.constant 0 : index
    %c0_18 = arith.constant 0 : index
    %27 = vector.load %arg7[%c0_17, %c0_18] : memref<1x1xf32, #tpu.memory_space<vmem>>, vector<1x1xf32>
    %28 = vector.broadcast %27 : vector<1x1xf32> to vector<8x1xf32>
    %29 = arith.addf %26, %28 : vector<8x1xf32>
    %c0_19 = arith.constant 0 : index
    %c0_20 = arith.constant 0 : index
    %30 = vector.load %arg8[%c0_19, %c0_20] : memref<8x1xf32, #tpu.memory_space<vmem>>, vector<8x1xf32>
    tpu.vector_store %arg8[%c0_19, %c0_20], %29 {strides = array<i32>} : memref<8x1xf32, #tpu.memory_space<vmem>>, vector<8x1xf32>,
    return
  }
  func.func @transform_0(%arg0: i32) -> (i32, i32) {
    %c0_i32 = arith.constant 0 : i32
    %c0_i32_0 = arith.constant 0 : i32
    return %arg0, %c0_i32 : i32, i32
  }
  func.func @transform_1(%arg0: i32) -> (i32, i32) {
    %c0_i32 = arith.constant 0 : i32
    %c0_i32_0 = arith.constant 0 : i32
    %c0_i32_1 = arith.constant 0 : i32
    return %c0_i32, %c0_i32_0 : i32, i32
  }
  func.func @transform_2(%arg0: i32) -> (i32, i32) {
    %c0_i32 = arith.constant 0 : i32
    %c0_i32_0 = arith.constant 0 : i32
    %c0_i32_1 = arith.constant 0 : i32
    return %c0_i32, %c0_i32_0 : i32, i32
  }
  func.func @transform_3(%arg0: i32) -> (i32, i32) {
    %c0_i32 = arith.constant 0 : i32
    %c0_i32_0 = arith.constant 0 : i32
    %c0_i32_1 = arith.constant 0 : i32
    return %c0_i32, %c0_i32_0 : i32, i32
  }
  func.func @transform_4(%arg0: i32) -> (i32, i32) {
    %c0_i32 = arith.constant 0 : i32
    %c0_i32_0 = arith.constant 0 : i32
    %c0_i32_1 = arith.constant 0 : i32
    return %c0_i32, %c0_i32_0 : i32, i32
  }
  func.func @transform_5(%arg0: i32) -> (i32, i32) {
    %c0_i32 = arith.constant 0 : i32
    %c0_i32_0 = arith.constant 0 : i32
    %c0_i32_1 = arith.constant 0 : i32
    return %c0_i32, %c0_i32_0 : i32, i32
  }
  func.func @transform_6(%arg0: i32) -> (i32, i32) {
    %c0_i32 = arith.constant 0 : i32
    %c0_i32_0 = arith.constant 0 : i32
    %c0_i32_1 = arith.constant 0 : i32
    return %c0_i32, %c0_i32_0 : i32, i32
  }
  func.func @transform_7(%arg0: i32) -> (i32, i32) {
    %c0_i32 = arith.constant 0 : i32
    %c0_i32_0 = arith.constant 0 : i32
    return %arg0, %c0_i32 : i32, i32
  }
}

</mosaic_0001>

<llo_original>
// kernel: tpu_custom_call.1
$region0: #{tpu_custom_call.1}
  #allocation0 [shape = 'u32[]', space=smem, size = 0x4, offset = 0x4, fixed_abs, tag = 'smem constant byte address 0x4 - core index']
  #allocation1 [shape = 'u32[72,128]{1,0:T(1,128)}', space=vmem, size = 0x9000, scoped, tag = 'internal scratch']
  #allocation2 [shape = 'f32[1,1]{1,0:T(1,128)S(1)}', space=vmem, size = 0x200, scoped, tag = 'scoped memory for tpu_custom_call.1']
  %s0 = inlined_call_operand.hbm [shape: bf16[8,39], index: 0, kind: input, shape index: {}]
  %s1 = inlined_call_operand.hbm [shape: bf16[39,39], index: 1, kind: input, shape index: {}]
  %s2 = inlined_call_operand.vmem [shape: f32[1,39], index: 2, kind: input, shape index: {}]
  %s3 = inlined_call_operand.hbm [shape: bf16[39,39], index: 3, kind: input, shape index: {}]
  %s4 = inlined_call_operand.vmem [shape: f32[1,39], index: 4, kind: input, shape index: {}]
  %s5 = inlined_call_operand.vmem [shape: f32[1,39], index: 5, kind: input, shape index: {}]
  %s6 = inlined_call_operand.<no memory space> [shape: f32[1,1], index: 6, kind: input, shape index: {}]
  %s7 = inlined_call_operand.vmem [shape: f32[8,1], index: 7, kind: output, shape index: {}]
  %s8 = sld [smem:[#allocation0]]
  $region50: #{tpu_custom_call.1} parent=0
    _
  %s10 = ssub.s32 1, %s8
  %s11 = scalar_select 0, %s10, %s8
  %v12 = vstv %s6
  %13 = vst [vmem:[#allocation2] sm:$0x1] %v12
  $region1: #{tpu_custom_call.1} parent=0
    #allocation3 [shape = 'u8[2048]{0}', space=vmem, size = 0x800, scoped, tag = 'input window, operand 0, single buffered']
    #allocation4 [shape = 's32[1]{0}', space=sflag, size = 0x4, scoped, tag = 'scoped memory for tpu_custom_call.1']
    #allocation5 [shape = 'u8[10240]{0}', space=vmem, size = 0x2800, scoped, tag = 'input window, operand 1, single buffered']
    #allocation6 [shape = 's32[1]{0}', space=sflag, size = 0x4, scoped, tag = 'scoped memory for tpu_custom_call.1']
    #allocation7 [shape = 'u8[10240]{0}', space=vmem, size = 0x2800, scoped, tag = 'input window, operand 3, single buffered']
    %14 = vsyncpa [#allocation4], 0
    %15 = vsyncpa [#allocation6], 0
    // Predicated region
    $region2: #{tpu_custom_call.1} parent=1 // pred_check
      _
    $region3: #{tpu_custom_call.1} parent=1 // pred_check_branch
      %17 = sbr.rel (0) target = $region5
    $region4: #{tpu_custom_call.1} parent=1 // pred_region
      %19 = vsyncadd [#allocation4], 0
      %s21 = sshll.u32 %s0, 4
      %s22 = int_to_ptr.hbm [resolvable:$true] %s21
      %s23 = sshll.u32 [#allocation3], 4
      %s24 = int_to_ptr.vmem [resolvable:$true] %s23
      %26 = dma.hbm_to_vmem [thread:$0]  %s22, 64, %s24, [#allocation4]
    $region5: #{tpu_custom_call.1} parent=1 // pred_fallthru
      _
    // Predicated region
    $region6: #{tpu_custom_call.1} parent=1 // pred_check
      _
    $region7: #{tpu_custom_call.1} parent=1 // pred_check_branch
      %28 = sbr.rel (0) target = $region9
    $region8: #{tpu_custom_call.1} parent=1 // pred_region
      %30 = vsyncadd [#allocation6], 0
      %s31 = sshll.u32 %s1, 4
      %s32 = int_to_ptr.hbm [resolvable:$true] %s31
      %s33 = sshll.u32 [#allocation5], 4
      %s34 = int_to_ptr.vmem [resolvable:$true] %s33
      %39 = dma.hbm_to_vmem [thread:$0]  %s32, 320, %s34, [#allocation6], 64, 64, 4
    $region9: #{tpu_custom_call.1} parent=1 // pred_fallthru
      _
    // Predicated region
    $region10: #{tpu_custom_call.1} parent=1 // pred_check
      _
    $region11: #{tpu_custom_call.1} parent=1 // pred_check_branch
      %41 = sbr.rel (0) target = $region13
    $region12: #{tpu_custom_call.1} parent=1 // pred_region
      _
    $region13: #{tpu_custom_call.1} parent=1 // pred_fallthru
      _
    // Predicated region
    $region14: #{tpu_custom_call.1} parent=1 // pred_check
      _
    $region15: #{tpu_custom_call.1} parent=1 // pred_check_branch
      %43 = sbr.rel (0) target = $region17
    $region16: #{tpu_custom_call.1} parent=1 // pred_region
      %45 = vsyncadd [#allocation6], 0
      %s46 = sshll.u32 %s3, 4
      %s47 = int_to_ptr.hbm [resolvable:$true] %s46
      %s48 = sshll.u32 [#allocation7], 4
      %s49 = int_to_ptr.vmem [resolvable:$true] %s48
      %54 = dma.hbm_to_vmem [thread:$0]  %s47, 320, %s49, [#allocation6], 64, 64, 4
    $region17: #{tpu_custom_call.1} parent=1 // pred_fallthru
      _
    // Predicated region
    $region18: #{tpu_custom_call.1} parent=1 // pred_check
      _
    $region19: #{tpu_custom_call.1} parent=1 // pred_check_branch
      %56 = sbr.rel (0) target = $region21
    $region20: #{tpu_custom_call.1} parent=1 // pred_region
      _
    $region21: #{tpu_custom_call.1} parent=1 // pred_fallthru
      _
    // Predicated region
    $region22: #{tpu_custom_call.1} parent=1 // pred_check
      _
    $region23: #{tpu_custom_call.1} parent=1 // pred_check_branch
      %58 = sbr.rel (0) target = $region25
    $region24: #{tpu_custom_call.1} parent=1 // pred_region
      _
    $region25: #{tpu_custom_call.1} parent=1 // pred_fallthru
      _
    // Predicated region
    $region26: #{tpu_custom_call.1} parent=1 // pred_check
      _
    $region27: #{tpu_custom_call.1} parent=1 // pred_check_branch
      %60 = sbr.rel (0) target = $region29
    $region28: #{tpu_custom_call.1} parent=1 // pred_region
      _
    $region29: #{tpu_custom_call.1} parent=1 // pred_fallthru
      _
    // Predicated region
    $region30: #{tpu_custom_call.1} parent=1 // pred_check
      _
    $region31: #{tpu_custom_call.1} parent=1 // pred_check_branch
      %62 = sbr.rel (0) target = $region33
    $region32: #{tpu_custom_call.1} parent=1 // pred_region
      %64 = dma.done [#allocation4], 64
    $region33: #{tpu_custom_call.1} parent=1 // pred_fallthru
      _
    // Predicated region
    $region34: #{tpu_custom_call.1} parent=1 // pred_check
      _
    $region35: #{tpu_custom_call.1} parent=1 // pred_check_branch
      %66 = sbr.rel (0) target = $region37
    $region36: #{tpu_custom_call.1} parent=1 // pred_region
      %68 = dma.done [#allocation6], 320
    $region37: #{tpu_custom_call.1} parent=1 // pred_fallthru
      _
    // Predicated region
    $region38: #{tpu_custom_call.1} parent=1 // pred_check
      _
    $region39: #{tpu_custom_call.1} parent=1 // pred_check_branch
      %70 = sbr.rel (0) target = $region41
    $region40: #{tpu_custom_call.1} parent=1 // pred_region
      %72 = dma.done [#allocation6], 320
    $region41: #{tpu_custom_call.1} parent=1 // pred_fallthru
      _
    %v74 = vld [vmem:[#allocation3] sm:$0xf]
    %v75 = vld [vmem:[#allocation5] sm:$0xf]
    %v76 = vld [vmem:[#allocation5 + $0x4] sm:$0xf]
    %v77 = vld [vmem:[#allocation5 + $0x8] sm:$0xf]
    %v78 = vld [vmem:[#allocation5 + $0xc] sm:$0xf]
    %v79 = vld [vmem:[#allocation5 + $0x10] sm:$0xf]
    %v80 = vld [vmem:[%s2] sm:$0x1]
    %v82 = vperm.slane %v80, 0
    %v89 = vunpack.c.l.b16 %v75
    %v90 = vunpack.c.l.b16 %v76
    %v91 = vunpack.c.l.b16 %v77
    %v92 = vunpack.c.l.b16 %v78
    %v93 = vunpack.c.l.b16 %v79
    %v94 = vpack.c.b16 %v90, %v89
    %v95 = vpack.c.b16 %v92, %v91
    %v96 = vpack.c.b16 %v93, %v93
    %vm99 = vcmask 318464
    %v101 = vsel %vm99, %v74, 0
    %vm103 = vcmask 1042432
    %vm104 = vcmask 1043456
    %v105 = vsel %vm103, 4294967295, 65535
    %v106 = vsel %vm104, %v105, 0
    %v108 = vand.u32 %v96, %v106
    %110 = vmatpush.bf16.msra.mxu0 0
    %111 = vmatpush.bf16.msra.mxu0 0
    %112 = vmatpush.bf16.msra.mxu0 0
    %113 = vmatpush.bf16.msra.mxu0 0
    %114 = vmatpush.bf16.msra.mxu0 0
    %115 = vmatpush.bf16.msra.mxu0 %v108
    %116 = vmatpush.bf16.msra.mxu0 %v95
    %117 = vmatpush.bf16.msra.mxu0 %v94
    %118 = vmatmul.bf16.gmra.mxu0 %v101
    %v119 = vpop.f32.mrf.mxu0
    %v120 = vadd.f32 %v82, %v119
    %v121 = vpop.f32.mrf.mxu0
    %122 = vdwg.mxu0
    %vm123 = vcmp.gt.f32.partialorder %v120, 0.0
    %v124 = vmul.f32 %v120, 0.01
    %v125 = vsel %vm123, %v120, %v124
    %v126 = vpack.c.bf16 %v125, %v125
    %v127 = vld [vmem:[#allocation7] sm:$0xf]
    %v128 = vld [vmem:[#allocation7 + $0x4] sm:$0xf]
    %v129 = vld [vmem:[#allocation7 + $0x8] sm:$0xf]
    %v130 = vld [vmem:[#allocation7 + $0xc] sm:$0xf]
    %v131 = vld [vmem:[#allocation7 + $0x10] sm:$0xf]
    %v132 = vld [vmem:[%s4] sm:$0x1]
    %v134 = vperm.slane %v132, 0
    %v141 = vunpack.c.l.b16 %v127
    %v142 = vunpack.c.l.b16 %v128
    %v143 = vunpack.c.l.b16 %v129
    %v144 = vunpack.c.l.b16 %v130
    %v145 = vunpack.c.l.b16 %v131
    %v146 = vpack.c.b16 %v142, %v141
    %v147 = vpack.c.b16 %v144, %v143
    %v148 = vpack.c.b16 %v145, %v145
    %v152 = vsel %vm99, %v126, 0
    %v155 = vand.u32 %v148, %v106
    %157 = vmatpush.bf16.msra.mxu0 0
    %158 = vmatpush.bf16.msra.mxu0 0
    %159 = vmatpush.bf16.msra.mxu0 0
    %160 = vmatpush.bf16.msra.mxu0 0
    %161 = vmatpush.bf16.msra.mxu0 0
    %162 = vmatpush.bf16.msra.mxu0 %v155
    %163 = vmatpush.bf16.msra.mxu0 %v147
    %164 = vmatpush.bf16.msra.mxu0 %v146
    %165 = vmatmul.bf16.gmra.mxu0 %v152
    %v166 = vpop.f32.mrf.mxu0
    %v167 = vadd.f32 %v134, %v166
    %v168 = vpop.f32.mrf.mxu0
    %169 = vdwg.mxu0
    %vm170 = vcmp.gt.f32.partialorder %v167, 0.0
    %v171 = vmul.f32 %v167, 0.01
    %v172 = vsel %vm170, %v167, %v171
    %v173 = vld [vmem:[%s5] sm:$0x1]
    %v175 = vperm.slane %v173, 0
    %v177 = vmul.f32 %v172, %v175
    %v178 = vsel %vm99, %v177, 0.0
    %179 = vadd.xlane.f32.xlu0 %v178
    %v180 = vpop.xlane.xlu0 %179
    %v181 = vld [vmem:[#allocation2] sm:$0x1]
    %v183 = vperm.slane %v181, 0
    %v185 = vadd.f32 %v180, %v183
    %vm186 = vcmask 7168
    %187 = vst.msk [vmem:[%s7] sm:$0xff] %vm186, %v185
    // Predicated region
    $region42: #{tpu_custom_call.1} parent=1 // pred_check
      _
    $region43: #{tpu_custom_call.1} parent=1 // pred_check_branch
      %189 = sbr.rel (0) target = $region45
    $region44: #{tpu_custom_call.1} parent=1 // pred_region
      _
    $region45: #{tpu_custom_call.1} parent=1 // pred_fallthru
      _
    // Predicated region
    $region46: #{tpu_custom_call.1} parent=1 // pred_check
      _
    $region47: #{tpu_custom_call.1} parent=1 // pred_check_branch
      %191 = sbr.rel (0) target = $region49
    $region48: #{tpu_custom_call.1} parent=1 // pred_region
      _
    $region49: #{tpu_custom_call.1} parent=1 // pred_fallthru
      _
    %192 = vsyncpa [#allocation4], 1
    %193 = vsyncpa [#allocation6], 1

</llo_original>
